<compile_context>
chip_gen: v7x
topology: tpu7x:2x2x1
jax: 0.10.0
libtpu: 0.0.40
codegen_flags: <defaults>
</compile_context>

<pallas_src>
import jax
import jax.numpy as jnp
from jax.experimental import pallas as pl
from jax.experimental.pallas import tpu as pltpu


# ---------------------------------------------------------------------------
# Prep kernel 1: row-wise log_softmax of theta, zero-padded on the E (lane)
# axis to a multiple of 128 so the main kernel can fetch aligned chunks.
# ---------------------------------------------------------------------------
def _log_softmax_rows_kernel(x_ref, o_ref):
    x = x_ref[...].astype(jnp.float32)
    mx = jnp.max(x, axis=-1, keepdims=True)
    ls = (x - mx) - jnp.log(jnp.sum(jnp.exp(x - mx), axis=-1, keepdims=True))
    pad = o_ref.shape[1] - x.shape[1]
    if pad:
        # Padded columns are never selected (e < E); zeros keep them finite.
        ls = jnp.concatenate(
            [ls, jnp.zeros((x.shape[0], pad), jnp.float32)], axis=-1)
    o_ref[...] = ls


def _log_softmax_rows(theta, e_pad):
    F, E = theta.shape
    # VMEM-aware row tile: (tf, E) in + (tf, E_pad) out, both double-buffered.
    budget = 8 * 1024 * 1024
    per_row = (E + e_pad) * 4 * 2
    cap = max(8, budget // per_row)
    tf = None
    for cand in (512, 256, 128, 64, 32, 16, 8):
        if cand <= cap and F % cand == 0:
            tf = cand
            break
    if tf is None:
        tf = min(F, max(8, cap))   # ragged last block handled by Pallas
    return pl.pallas_call(
        _log_softmax_rows_kernel,
        out_shape=jax.ShapeDtypeStruct((F, e_pad), jnp.float32),
        grid=(pl.cdiv(F, tf),),
        in_specs=[pl.BlockSpec((tf, E), lambda i: (i, 0))],
        out_specs=pl.BlockSpec((tf, e_pad), lambda i: (i, 0)),
        compiler_params=pltpu.CompilerParams(
            dimension_semantics=("parallel",)),
    )(theta.astype(jnp.float32))


# ---------------------------------------------------------------------------
# Prep kernel 2: distortion / delta matrix D, computed once.
# ---------------------------------------------------------------------------
def _delta_kernel(scal_ref, d_ref):
    """scal_ref (SMEM f32[5]) = [m, n, log(p0), log(1-p0), lambda]."""
    M, NF = d_ref.shape
    m_f, n_f = scal_ref[0], scal_ref[1]
    log_p0, log_1mp0, lambd = scal_ref[2], scal_ref[3], scal_ref[4]

    i_idx = jax.lax.broadcasted_iota(jnp.float32, (M, NF), 0)
    j_idx = jax.lax.broadcasted_iota(jnp.float32, (M, NF), 1)
    H = -jnp.abs(i_idx / m_f - j_idx / n_f)
    # log_softmax over j = 1..n (NULL column j=0 masked out of the softmax)
    logits = lambd * H + jnp.where(j_idx == 0.0, jnp.float32(-1e30),
                                   jnp.float32(0.0))
    mx = jnp.max(logits, axis=-1, keepdims=True)
    ls = logits - mx - jnp.log(jnp.sum(jnp.exp(logits - mx), axis=-1,
                                       keepdims=True))
    d_ref[...] = jnp.where(j_idx == 0.0, log_p0, log_1mp0 + ls)


def _delta_matrix(scalars, M, NF):
    return pl.pallas_call(
        _delta_kernel,
        out_shape=jax.ShapeDtypeStruct((M, NF), jnp.float32),
        grid=(1,),
        in_specs=[pl.BlockSpec(memory_space=pltpu.MemorySpace.SMEM)],
        out_specs=pl.BlockSpec((M, NF), lambda i: (0, 0)),
    )(scalars)


# ---------------------------------------------------------------------------
# Main kernel: one grid step = TB batch rows; per row, loop over E chunks with
# a manual double-buffered row gather from HBM.
#   f_ref      SMEM prefetch  i32[B_pad*NF]     source ids (flattened)
#   d_ref      VMEM           f32[M, NF]        distortion matrix (resident)
#   e_ref      VMEM           i32[1, TB, M]     target ids for this block
#   theta_ref  HBM (pl.ANY)   f32[F, E_pad]     log_softmax(theta), padded
#   out_ref    VMEM           f32[1, TB, M]
#   gbuf       VMEM scratch   f32[2, NF, EC]    double-buffered gathered chunk
#   acc_ref    VMEM scratch   f32[M, NF]        per-row accumulator over chunks
#   sems                      DMA sems (2,)     one per buffer slot
# ---------------------------------------------------------------------------
def _fastalign_block_kernel(f_ref, d_ref, e_ref, theta_ref, out_ref,
                            gbuf, acc_ref, sems):
    _, TB, M = e_ref.shape
    NF = d_ref.shape[1]
    EC = gbuf.shape[2]
    NC = theta_ref.shape[1] // EC
    NSTEPS = TB * NC
    b0 = pl.program_id(0) * TB

    def start_fetch(s, slot):
        """Gather the NF rows of E-chunk (s % NC) for batch row (s // NC)."""
        bb = s // NC
        c = s - bb * NC
        base = (b0 + bb) * NF
        col0 = c * EC
        for j in range(NF):                      # NF starts, ONE semaphore
            row = f_ref[base + j]
            pltpu.make_async_copy(
                theta_ref.at[pl.ds(row, 1), pl.ds(col0, EC)],
                gbuf.at[slot, pl.ds(j, 1), :],
                sems.at[slot],
            ).start()

    def wait_slot(slot):
        # Single combined wait: descriptor size (NF, EC) == sum of NF starts.
        pltpu.make_async_copy(
            theta_ref.at[pl.ds(0, NF), pl.ds(0, EC)],
            gbuf.at[slot],
            sems.at[slot],
        ).wait()

    d = d_ref[...]                                            # (M, NF)
    e_all = e_ref[...]                                        # (1, TB, M)
    iota0 = jax.lax.broadcasted_iota(jnp.int32, (1, EC), 1)   # hoisted

    start_fetch(0, 0)                                         # prime slot 0

    for bb in range(TB):                                      # short, unrolled
        ids = e_all[0, bb][:, None]                           # (M, 1) int32
        acc_ref[...] = jnp.zeros_like(acc_ref)                # (M, NF)

        @pl.loop(0, NC)
        def _(c):
            s = bb * NC + c
            slot = s % 2
            wait_slot(slot)

            @pl.when(s + 1 < NSTEPS)                          # overlap next DMA
            def _():
                start_fetch(s + 1, 1 - slot)

            g = gbuf[slot]                                    # (NF, EC)
            onehot = (iota0 + c * EC == ids).astype(jnp.float32)   # (M, EC)
            # acc[i, j] += theta_ls[f[b, j], e[b, i]] restricted to this chunk.
            acc_ref[...] += jax.lax.dot_general(
                onehot, g,
                dimension_numbers=(((1,), (1,)), ((), ())),
                precision=jax.lax.Precision.HIGHEST,
                preferred_element_type=jnp.float32)

        # Epilogue folded per batch row: add D, logsumexp over alignments j.
        prob = acc_ref[...] + d                               # (M, NF)
        pmax = jnp.max(prob, axis=-1, keepdims=True)          # (M, 1)
        lse = pmax[:, 0] + jnp.log(
            jnp.sum(jnp.exp(prob - pmax), axis=-1))           # (M,)
        out_ref[0, bb, :] = lse


def fastalign_forward(e, f, m, n, theta, p0_param, lambd_param):
    """Pallas implementation of FastAlignDistribution.forward."""
    B, M = e.shape
    Bf, NF = f.shape
    assert Bf == B and NF == n + 1 and M == m
    F, E = theta.shape

    # Tiny parameter transforms (glue): p0 = sigmoid(p_0), lambda = exp(lambd).
    p0_logit = p0_param[0].astype(jnp.float32)
    log_p0 = -jax.nn.softplus(-p0_logit)       # log(sigmoid(p0_logit))
    log_1mp0 = -jax.nn.softplus(p0_logit)      # log(1 - sigmoid(p0_logit))
    lambd = jnp.exp(lambd_param[0].astype(jnp.float32))
    scalars = jnp.stack([
        jnp.float32(m), jnp.float32(n), log_p0, log_1mp0, lambd
    ]).astype(jnp.float32)

    # Lane-aligned E and chunk width (bounds VMEM on v7x, aligned DMAs).
    E_pad = pl.cdiv(E, 128) * 128
    EC = next(c for c in (2048, 1024, 512, 256, 128) if E_pad % c == 0)

    # Hoisted, computed once.
    theta_ls = _log_softmax_rows(theta, E_pad)   # (F, E_pad) f32, stays in HBM
    dmat = _delta_matrix(scalars, M, NF)         # (M, NF)    f32

    # Batch rows per grid step: amortize per-step overhead but keep >= 2 grid
    # steps so the "parallel" axis can be sharded across both v7x TensorCores.
    TB = 1 if B <= 1 else min(8, pl.cdiv(B, 2))
    G = pl.cdiv(B, TB)
    B_pad = G * TB

    e_pad = jnp.pad(e.astype(jnp.int32), ((0, B_pad - B), (0, 0)))
    e_blk = e_pad.reshape(G, TB, M)              # (G, TB, M)
    f_pad = jnp.pad(f.astype(jnp.int32), ((0, B_pad - B), (0, 0)))
    f_flat = f_pad.reshape(-1)                   # (B_pad * NF,) -> SMEM

    out = pl.pallas_call(
        _fastalign_block_kernel,
        out_shape=jax.ShapeDtypeStruct((G, TB, M), jnp.float32),
        grid_spec=pltpu.PrefetchScalarGridSpec(
            num_scalar_prefetch=1,                               # f -> SMEM
            grid=(G,),
            in_specs=[
                pl.BlockSpec((M, NF), lambda b, fp: (0, 0)),     # D, resident
                pl.BlockSpec((1, TB, M), lambda b, fp: (b, 0, 0)),   # e ids
                pl.BlockSpec(memory_space=pl.ANY),               # theta_ls HBM
            ],
            out_specs=pl.BlockSpec((1, TB, M), lambda b, fp: (b, 0, 0)),
            scratch_shapes=[
                pltpu.VMEM((2, NF, EC), jnp.float32),            # gather buf
                pltpu.VMEM((M, NF), jnp.float32),                # accumulator
                pltpu.SemaphoreType.DMA((2,)),                   # 1 sem / slot
            ],
        ),
        compiler_params=pltpu.CompilerParams(
            dimension_semantics=("parallel",)),                  # megacore
    )(f_flat, dmat, e_blk, theta_ls)
    return out.reshape(B_pad, M)[:B]


def reference_forward(e, f, m, n, theta, p0_param, lambd_param):
    """Pure-JAX mirror of the torch module (for correctness check)."""
    theta_ls = jax.nn.log_softmax(theta, axis=-1)
    lambd = jnp.exp(lambd_param)[0]
    p0 = jax.nn.sigmoid(p0_param)[0]
    i = jnp.arange(m, dtype=jnp.float32)[:, None]
    j = jnp.arange(n + 1, dtype=jnp.float32)[None, :]
    H = -jnp.abs(i / m - j / n)                              # (m, n+1)
    p = jax.nn.log_softmax(lambd * H[:, 1:], axis=-1)        # (m, n)
    D = jnp.concatenate(
        [jnp.full((m, 1), jnp.log(p0)), jnp.log(1.0 - p0) + p], axis=-1)
    t = theta_ls[f[:, None, :], e[:, :, None]]               # (B, m, n+1)
    prob = D[None] + t
    return jax.nn.logsumexp(prob, axis=-1)                   # (B, m)


if __name__ == "__main__":
    E_SIZE, F_SIZE = 32, 32
    B, m_len, n_len = 2, 8, 8

    key = jax.random.PRNGKey(0)
    k1, k2, k3, k4, k5 = jax.random.split(key, 5)
    theta = 0.1 * jax.random.normal(k1, (F_SIZE, E_SIZE), jnp.float32)
    p0_param = 0.1 * jax.random.normal(k2, (1,), jnp.float32)
    lambd_param = 0.1 * jax.random.normal(k3, (1,), jnp.float32)

    e = jax.random.randint(k4, (B, m_len), 0, E_SIZE, dtype=jnp.int32)
    f = jax.random.randint(k5, (B, n_len + 1), 0, F_SIZE, dtype=jnp.int32)
    f = f.at[:, 0].set(0)  # NULL source token at j = 0

    out = fastalign_forward(e, f, m_len, n_len, theta, p0_param, lambd_param)
    out = jax.block_until_ready(out)

    ref = reference_forward(e, f, m_len, n_len, theta, p0_param, lambd_param)
    assert out.shape == (B, m_len), out.shape
    assert jnp.allclose(out, ref, atol=1e-5, rtol=1e-5), (out, ref)
    print("KERNEL_OK")
</pallas_src>

<mosaic_0001>
module attributes {stable_mosaic.version = 11 : i64} {
  func.func @_log_softmax_rows_kernel(%arg0: i32, %arg1: memref<32x32xf32, #tpu.memory_space<vmem>>, %arg2: memref<32x128xf32, #tpu.memory_space<vmem>>) attributes {dimension_semantics = [#tpu.dimension_semantics<parallel>], iteration_bounds = array<i64: 1>, scalar_prefetch = 0 : i64, scratch_operands = 0 : i64, tpu.core_type = #tpu.core_type<tc>, window_params = [{transform_indices = @transform_0, window_bounds = array<i64: 32, 32>}, {transform_indices = @transform_1, window_bounds = array<i64: 32, 128>}]} {
    %c0 = arith.constant 0 : index
    %c0_0 = arith.constant 0 : index
    %0 = vector.load %arg1[%c0, %c0_0] : memref<32x32xf32, #tpu.memory_space<vmem>>, vector<32x32xf32>
    %cst = arith.constant dense<0xFF800000> : vector<32xf32>
    %1 = vector.multi_reduction <maximumf>, %0, %cst [1] : vector<32x32xf32> to vector<32xf32>
    %2 = vector.shape_cast %1 : vector<32xf32> to vector<32x1xf32>
    %3 = vector.broadcast %2 : vector<32x1xf32> to vector<32x32xf32>
    %4 = arith.subf %0, %3 : vector<32x32xf32>
    %5 = vector.broadcast %2 : vector<32x1xf32> to vector<32x32xf32>
    %6 = arith.subf %0, %5 : vector<32x32xf32>
    %7 = math.exp %6 : vector<32x32xf32>
    %cst_1 = arith.constant dense<0.000000e+00> : vector<32xf32>
    %8 = vector.multi_reduction <add>, %7, %cst_1 [1] : vector<32x32xf32> to vector<32xf32>
    %9 = vector.shape_cast %8 : vector<32xf32> to vector<32x1xf32>
    %10 = math.log %9 : vector<32x1xf32>
    %11 = vector.broadcast %10 : vector<32x1xf32> to vector<32x32xf32>
    %12 = arith.subf %4, %11 : vector<32x32xf32>
    %cst_2 = arith.constant 0.000000e+00 : f32
    %13 = vector.broadcast %cst_2 : f32 to vector<32x96xf32>
    %14 = tpu.concatenate %12, %13 in 1 : vector<32x32xf32>, vector<32x96xf32> -> vector<32x128xf32>
    %c0_3 = arith.constant 0 : index
    %c0_4 = arith.constant 0 : index
    %15 = vector.load %arg2[%c0_3, %c0_4] : memref<32x128xf32, #tpu.memory_space<vmem>>, vector<32x128xf32>
    tpu.vector_store %arg2[%c0_3, %c0_4], %14 {strides = array<i32>} : memref<32x128xf32, #tpu.memory_space<vmem>>, vector<32x128xf32>,
    return
  }
  func.func @transform_0(%arg0: i32) -> (i32, i32) {
    %c0_i32 = arith.constant 0 : i32
    %c0_i32_0 = arith.constant 0 : i32
    return %arg0, %c0_i32 : i32, i32
  }
  func.func @transform_1(%arg0: i32) -> (i32, i32) {
    %c0_i32 = arith.constant 0 : i32
    %c0_i32_0 = arith.constant 0 : i32
    return %arg0, %c0_i32 : i32, i32
  }
}

</mosaic_0001>

<llo_original>
// kernel: tpu_custom_call.1
$region0: #{tpu_custom_call.1}
  #allocation0 [shape = 'u32[]', space=smem, size = 0x4, offset = 0x4, fixed_abs, tag = 'smem constant byte address 0x4 - core index']
  #allocation1 [shape = 'u32[144,128]{1,0:T(1,128)}', space=vmem, size = 0x12000, scoped, tag = 'internal scratch']
  %s0 = inlined_call_operand.hbm [shape: f32[32,32], index: 0, kind: input, shape index: {}]
  %s1 = inlined_call_operand.hbm [shape: f32[32,128], index: 1, kind: output, shape index: {}]
  %s2 = sld [smem:[#allocation0]]
  $region18: #{tpu_custom_call.1} parent=0
    _
  %s4 = ssub.s32 1, %s2
  %s5 = scalar_select 0, %s4, %s2
  $region1: #{tpu_custom_call.1} parent=0
    #allocation2 [shape = 'u8[16384]{0}', space=vmem, size = 0x4000, scoped, tag = 'input window, operand 0, single buffered']
    #allocation3 [shape = 's32[1]{0}', space=sflag, size = 0x4, scoped, tag = 'scoped memory for tpu_custom_call.1']
    #allocation4 [shape = 's32[1]{0}', space=sflag, size = 0x4, scoped, tag = 'scoped memory for tpu_custom_call.1']
    #allocation5 [shape = 'u8[16384]{0}', space=vmem, size = 0x4000, scoped, tag = 'output window, operand 0, single buffered']
    %6 = vsyncpa [#allocation3], 0
    %7 = vsyncpa [#allocation4], 0
    // Predicated region
    $region2: #{tpu_custom_call.1} parent=1 // pred_check
      _
    $region3: #{tpu_custom_call.1} parent=1 // pred_check_branch
      %9 = sbr.rel (0) target = $region5
    $region4: #{tpu_custom_call.1} parent=1 // pred_region
      %s11 = ssub.s32 512, 512
      %12 = vsyncadd [#allocation3], %s11
      %s13 = sshll.u32 [#allocation2], 4
      %s14 = int_to_ptr.vmem [resolvable:$true] %s13
      %19 = dma.hbm_to_vmem [thread:$0]  %s0, 512, %s14, [#allocation3], 128, 128, 8
    $region5: #{tpu_custom_call.1} parent=1 // pred_fallthru
      _
    // Predicated region
    $region6: #{tpu_custom_call.1} parent=1 // pred_check
      _
    $region7: #{tpu_custom_call.1} parent=1 // pred_check_branch
      %21 = sbr.rel (0) target = $region9
    $region8: #{tpu_custom_call.1} parent=1 // pred_region
      %22 = dma.done [#allocation3], 512
    $region9: #{tpu_custom_call.1} parent=1 // pred_fallthru
      _
    %v23 = vld [vmem:[#allocation2] sm:$0xff]
    %v24 = vld [vmem:[#allocation2 + $0x8] sm:$0xff]
    %v25 = vld [vmem:[#allocation2 + $0x10] sm:$0xff]
    %v26 = vld [vmem:[#allocation2 + $0x18] sm:$0xff]
    %vm27 = vcmask 261120
    %v28 = vsel %vm27, %v23, -inf
    %29 = vmax.xlane.f32.xlu0 %v28
    %v30 = vpop.xlane.xlu0 %29
    %v31 = vsel %vm27, %v24, -inf
    %32 = vmax.xlane.f32.xlu0 %v31
    %v33 = vpop.xlane.xlu0 %32
    %v34 = vsel %vm27, %v25, -inf
    %35 = vmax.xlane.f32.xlu0 %v34
    %v36 = vpop.xlane.xlu0 %35
    %v37 = vsel %vm27, %v26, -inf
    %38 = vmax.xlane.f32.xlu0 %v37
    %v39 = vpop.xlane.xlu0 %38
    %v40 = vsub.f32 %v23, %v30
    %v41 = vsub.f32 %v24, %v33
    %v42 = vsub.f32 %v25, %v36
    %v43 = vsub.f32 %v26, %v39
    %v44 = vmul.f32 %v40, 1.442695
    %v45 = vpow.pop %v44
    %v46 = vmul.f32 %v41, 1.442695
    %v47 = vpow.pop %v46
    %v48 = vmul.f32 %v42, 1.442695
    %v49 = vpow.pop %v48
    %v50 = vmul.f32 %v43, 1.442695
    %v51 = vpow.pop %v50
    %v52 = vsel %vm27, %v45, 0.0
    %53 = vadd.xlane.f32.xlu0 %v52
    %v54 = vpop.xlane.xlu0 %53
    %v55 = vsel %vm27, %v47, 0.0
    %56 = vadd.xlane.f32.xlu0 %v55
    %v57 = vpop.xlane.xlu0 %56
    %v58 = vsel %vm27, %v49, 0.0
    %59 = vadd.xlane.f32.xlu0 %v58
    %v60 = vpop.xlane.xlu0 %59
    %v61 = vsel %vm27, %v51, 0.0
    %62 = vadd.xlane.f32.xlu0 %v61
    %v63 = vpop.xlane.xlu0 %62
    %v64 = vlog2.pop %v54
    %v65 = vmul.f32 %v64, 0.6931472
    %v66 = vlog2.pop %v57
    %v67 = vmul.f32 %v66, 0.6931472
    %v68 = vlog2.pop %v60
    %v69 = vmul.f32 %v68, 0.6931472
    %v70 = vlog2.pop %v63
    %v71 = vmul.f32 %v70, 0.6931472
    %v72 = vsub.f32 %v40, %v65
    %v73 = vsub.f32 %v41, %v67
    %v74 = vsub.f32 %v42, %v69
    %v75 = vsub.f32 %v43, %v71
    %v76 = vsel %vm27, %v72, 0.0
    %v77 = vsel %vm27, %v73, 0.0
    %v78 = vsel %vm27, %v74, 0.0
    %v79 = vsel %vm27, %v75, 0.0
    %80 = vst [vmem:[#allocation5] sm:$0xff] %v76
    %81 = vst [vmem:[#allocation5 + $0x8] sm:$0xff] %v77
    %82 = vst [vmem:[#allocation5 + $0x10] sm:$0xff] %v78
    %83 = vst [vmem:[#allocation5 + $0x18] sm:$0xff] %v79
    // Predicated region
    $region10: #{tpu_custom_call.1} parent=1 // pred_check
      _
    $region11: #{tpu_custom_call.1} parent=1 // pred_check_branch
      %85 = sbr.rel (0) target = $region13
    $region12: #{tpu_custom_call.1} parent=1 // pred_region
      %s87 = ssub.s32 512, 512
      %88 = vsyncadd [#allocation4], %s87
      %s89 = sshll.u32 [#allocation5], 4
      %s90 = int_to_ptr.vmem [resolvable:$true] %s89
      %95 = dma.vmem_to_hbm [thread:$0]  %s90, 512, %s1, [#allocation4], 128, 128, 8
    $region13: #{tpu_custom_call.1} parent=1 // pred_fallthru
      _
    // Predicated region
    $region14: #{tpu_custom_call.1} parent=1 // pred_check
      _
    $region15: #{tpu_custom_call.1} parent=1 // pred_check_branch
      %97 = sbr.rel (0) target = $region17
    $region16: #{tpu_custom_call.1} parent=1 // pred_region
      %98 = dma.done [#allocation4], 512
    $region17: #{tpu_custom_call.1} parent=1 // pred_fallthru
      _
    %99 = vsyncpa [#allocation3], 1
    %100 = vsyncpa [#allocation4], 1

</llo_original>
